<compile_context>
chip_gen: v6e
topology: v6e:2x2x1
jax: 0.10.0
libtpu: 0.0.40
codegen_flags: <defaults>
</compile_context>

<pallas_src>
import math

import jax
import jax.numpy as jnp
from jax.experimental import pallas as pl
from jax.experimental.pallas import tpu as pltpu


# ----------------------------------------------------------------------------
# Parameter construction (deterministic, mirrors nn.Module.__init__)
# ----------------------------------------------------------------------------
def make_positional_encoding(d_model: int, max_len: int = 5000,
                             dtype=jnp.float32) -> jnp.ndarray:
    """Builds the (1, max_len, d_model) sinusoidal table, identical to PyTorch.

    Pass dtype=<activation dtype> so the forward pass never has to cast the table.
    """
    position = jnp.arange(0, max_len, dtype=jnp.float32)[:, None]            # (max_len, 1)
    div_term = jnp.exp(
        jnp.arange(0, d_model, 2, dtype=jnp.float32) * (-math.log(10000.0) / d_model)
    )                                                                         # (ceil(d/2),)
    angles = position * div_term                                              # (max_len, ceil(d/2))
    enc = jnp.zeros((max_len, d_model), dtype=jnp.float32)
    enc = enc.at[:, 0::2].set(jnp.sin(angles))
    enc = enc.at[:, 1::2].set(jnp.cos(angles)[:, : d_model // 2])
    return enc[None, :, :].astype(dtype)                                      # (1, max_len, d_model)


# ----------------------------------------------------------------------------
# Pallas kernel: out = x + pe   (pe row broadcast over the batch sublanes)
# ----------------------------------------------------------------------------
def _pe_add_kernel(x_ref, pe_ref, o_ref):
    # x: (tb, tc), pe: (1, tc) -> sublane-broadcast add, lane-dense store.
    o_ref[...] = x_ref[...] + pe_ref[...]


# ----------------------------------------------------------------------------
# Tiling helpers
# ----------------------------------------------------------------------------
_DEFAULT_TILE_BYTES_CAP = 6 * 1024 * 1024   # per x/out block (~25-36 MiB VMEM total)
_VMEM_LIMIT_BYTES = 48 * 1024 * 1024        # explicit: safe on v5e/v6e (128 MiB) & v7x (64 MiB)


def _round_down(x: int, m: int) -> int:
    return (x // m) * m


def _sublane_unit(dtype) -> int:
    # 8 rows per sublane tile for 32-bit, 16 for 16-bit, 32 for 8-bit dtypes.
    return max(8, 32 // jnp.dtype(dtype).itemsize)


def _choose_tiles(B: int, n: int, itemsize: int, unit: int, cap: int):
    """Pick (tb, tc) for the flattened (B, n) layout, block bytes <= cap."""
    row_bytes = n * itemsize
    if B * row_bytes <= cap:
        # Whole problem fits in one block: fold the batch, full lane extent.
        return B, n
    if unit * row_bytes <= cap:
        # Full rows fit: fold as many batch rows as the cap allows (multiple of unit).
        tb = _round_down(cap // row_bytes, unit)          # >= unit, < B
        return tb, n
    # Rows are huge: one sublane group of rows, tile the lane dimension.
    tb = B if B < unit else unit                          # full dim or multiple of 8
    tc = max(128, _round_down(cap // (tb * itemsize), 128))
    return tb, tc


# ----------------------------------------------------------------------------
# Forward wrapper
# ----------------------------------------------------------------------------
def positional_encoding_forward(x: jnp.ndarray, encoding: jnp.ndarray, *,
                                donate_x: bool = False,
                                tile_bytes_cap: int = _DEFAULT_TILE_BYTES_CAP) -> jnp.ndarray:
    """x: (B, S, D); encoding: (1, max_len, D).  Returns x + encoding[:, :S]."""
    B, S, D = x.shape
    max_len = encoding.shape[1]
    if S > max_len:
        raise ValueError(f"sequence length {S} exceeds positional-encoding max_len {max_len}")

    if encoding.dtype != x.dtype:
        # Prefer building the table in the activation dtype at init (see
        # make_positional_encoding(dtype=...)); this cast is a per-call fallback only.
        encoding = encoding.astype(x.dtype)

    n = S * D
    itemsize = jnp.dtype(x.dtype).itemsize
    unit = _sublane_unit(x.dtype)

    # Free, contiguous reshapes: no HBM traffic, no extra XLA copy.
    x2 = x.reshape(B, n)                           # (B, S*D)
    pe2 = encoding.reshape(1, max_len * D)         # first n columns == encoding[:, :S, :] flat

    tb, tc = _choose_tiles(B, n, itemsize, unit, tile_bytes_cap)
    grid = (pl.cdiv(n, tc), pl.cdiv(B, tb))        # batch innermost -> pe block stays resident

    cost = pl.CostEstimate(
        flops=B * n,
        transcendentals=0,
        bytes_accessed=(2 * B * n + n) * itemsize,
    )
    cparams = pltpu.CompilerParams(
        dimension_semantics=("parallel", "parallel"),
        vmem_limit_bytes=_VMEM_LIMIT_BYTES,
    )
    # Only alias when the caller actually donates x; otherwise XLA would insert a
    # defensive full copy of x and double the HBM traffic.
    io_aliases = {0: 0} if donate_x else {}

    out2 = pl.pallas_call(
        _pe_add_kernel,
        out_shape=jax.ShapeDtypeStruct((B, n), x.dtype),
        grid_spec=pltpu.PrefetchScalarGridSpec(
            num_scalar_prefetch=0,
            grid=grid,
            in_specs=[
                pl.BlockSpec((tb, tc), lambda c, b: (b, c)),   # x
                pl.BlockSpec((1, tc), lambda c, b: (0, c)),    # pe (batch-independent block)
            ],
            out_specs=pl.BlockSpec((tb, tc), lambda c, b: (b, c)),
        ),
        compiler_params=cparams,
        input_output_aliases=io_aliases,
        cost_estimate=cost,
    )(x2, pe2)
    return out2.reshape(B, S, D)


# ----------------------------------------------------------------------------
# Main
# ----------------------------------------------------------------------------
if __name__ == "__main__":
    max_len = 5000
    key = jax.random.PRNGKey(0)

    # Case 1 (module demo shape): B=2, S=8, D=32, f32 -> single fused block.
    B, S, D = 2, 8, 32
    x = jax.random.normal(key, (B, S, D), dtype=jnp.float32)
    enc = make_positional_encoding(D, max_len, dtype=jnp.float32)
    ref = x + enc[:, :S, :]
    out = jax.block_until_ready(positional_encoding_forward(x, enc))
    assert out.shape == (B, S, D)
    assert jnp.allclose(out, ref, atol=1e-6, rtol=1e-6)

    # Case 2: D=128, bf16 -> dtype-matched table, dtype-aware sublane unit.
    B2, S2, D2 = 2, 16, 128
    x2 = jax.random.normal(jax.random.PRNGKey(1), (B2, S2, D2), dtype=jnp.bfloat16)
    enc2 = make_positional_encoding(D2, max_len, dtype=jnp.bfloat16)
    ref2 = x2 + enc2[:, :S2, :]
    out2 = jax.block_until_ready(positional_encoding_forward(x2, enc2))
    assert out2.shape == (B2, S2, D2)
    assert jnp.allclose(out2.astype(jnp.float32), ref2.astype(jnp.float32), atol=1e-2)

    # Case 3: awkward shape (n not a multiple of 128), tiny cap forces the
    # lane-tiled path with a masked edge column block.
    B3, S3, D3 = 5, 7, 24
    x3 = jax.random.normal(jax.random.PRNGKey(2), (B3, S3, D3), dtype=jnp.float32)
    enc3 = make_positional_encoding(D3, max_len, dtype=jnp.float32)
    ref3 = x3 + enc3[:, :S3, :]
    out3 = jax.block_until_ready(
        positional_encoding_forward(x3, enc3, tile_bytes_cap=512))
    assert jnp.allclose(out3, ref3, atol=1e-6, rtol=1e-6)

    # Case 4: B not a multiple of 8, tiny cap forces batch tiling with a masked
    # edge batch block (and a 2x2 grid exercising both parallel axes).
    B4, S4, D4 = 9, 16, 32
    x4 = jax.random.normal(jax.random.PRNGKey(3), (B4, S4, D4), dtype=jnp.float32)
    enc4 = make_positional_encoding(D4, max_len, dtype=jnp.float32)
    ref4 = x4 + enc4[:, :S4, :]
    out4 = jax.block_until_ready(
        positional_encoding_forward(x4, enc4, tile_bytes_cap=8192))
    assert jnp.allclose(out4, ref4, atol=1e-6, rtol=1e-6)

    print("KERNEL_OK")
</pallas_src>

<mosaic_0001>
module attributes {stable_mosaic.version = 11 : i64} {
  func.func @_pe_add_kernel(%arg0: i32, %arg1: i32, %arg2: memref<2x256xf32, #tpu.memory_space<vmem>>, %arg3: memref<1x256xf32, #tpu.memory_space<vmem>>, %arg4: memref<2x256xf32, #tpu.memory_space<vmem>>) attributes {dimension_semantics = [#tpu.dimension_semantics<parallel>, #tpu.dimension_semantics<parallel>], iteration_bounds = array<i64: 1, 1>, scalar_prefetch = 0 : i64, scratch_operands = 0 : i64, tpu.core_type = #tpu.core_type<tc>, window_params = [{transform_indices = @transform_0, window_bounds = array<i64: 2, 256>}, {transform_indices = @transform_1, window_bounds = array<i64: 1, 256>}, {transform_indices = @transform_2, window_bounds = array<i64: 2, 256>}]} {
    %c0 = arith.constant 0 : index
    %c0_0 = arith.constant 0 : index
    %0 = vector.load %arg2[%c0, %c0_0] : memref<2x256xf32, #tpu.memory_space<vmem>>, vector<2x256xf32>
    %c0_1 = arith.constant 0 : index
    %c0_2 = arith.constant 0 : index
    %1 = vector.load %arg3[%c0_1, %c0_2] : memref<1x256xf32, #tpu.memory_space<vmem>>, vector<1x256xf32>
    %2 = vector.broadcast %1 : vector<1x256xf32> to vector<2x256xf32>
    %3 = arith.addf %0, %2 : vector<2x256xf32>
    %c0_3 = arith.constant 0 : index
    %c0_4 = arith.constant 0 : index
    %4 = vector.load %arg4[%c0_3, %c0_4] : memref<2x256xf32, #tpu.memory_space<vmem>>, vector<2x256xf32>
    tpu.vector_store %arg4[%c0_3, %c0_4], %3 {strides = array<i32>} : memref<2x256xf32, #tpu.memory_space<vmem>>, vector<2x256xf32>,
    return
  }
  func.func @transform_0(%arg0: i32, %arg1: i32) -> (i32, i32) {
    %c0_i32 = arith.constant 0 : i32
    return %arg1, %arg0 : i32, i32
  }
  func.func @transform_1(%arg0: i32, %arg1: i32) -> (i32, i32) {
    %c0_i32 = arith.constant 0 : i32
    %c0_i32_0 = arith.constant 0 : i32
    return %c0_i32, %arg0 : i32, i32
  }
  func.func @transform_2(%arg0: i32, %arg1: i32) -> (i32, i32) {
    %c0_i32 = arith.constant 0 : i32
    return %arg1, %arg0 : i32, i32
  }
}

</mosaic_0001>

<llo_original>
// kernel: tpu_custom_call.1
$region0: #{tpu_custom_call.1}
  #allocation0 [shape = 'u32[]', space=smem, size = 0x4, offset = 0x4, fixed_abs, tag = 'smem constant byte address 0x4 - core index']
  #allocation1 [shape = 'u32[144,128]{1,0:T(1,128)}', space=vmem, size = 0x12000, scoped, tag = 'internal scratch']
  %s0 = inlined_call_operand.hbm [shape: f32[2,256], index: 0, kind: input, shape index: {}]
  %s1 = inlined_call_operand.hbm [shape: f32[1,160000], index: 1, kind: input, shape index: {}]
  %s2 = inlined_call_operand.hbm [shape: f32[2,256], index: 2, kind: output, shape index: {}]
  %s3 = sld [smem:[#allocation0]]
  $region26: #{tpu_custom_call.1} parent=0
    _
  %s5 = ssub.s32 1, %s3
  %s6 = scalar_select 0, %s5, %s3
  $region1: #{tpu_custom_call.1} parent=0
    #allocation2 [shape = 'u8[2048]{0}', space=vmem, size = 0x800, scoped, tag = 'input window, operand 0, single buffered']
    #allocation3 [shape = 's32[1]{0}', space=sflag, size = 0x4, scoped, tag = 'scoped memory for tpu_custom_call.1']
    #allocation4 [shape = 's32[1]{0}', space=sflag, size = 0x4, scoped, tag = 'scoped memory for tpu_custom_call.1']
    #allocation5 [shape = 'u8[1024]{0}', space=vmem, size = 0x400, scoped, tag = 'input window, operand 1, single buffered']
    #allocation6 [shape = 's32[1]{0}', space=sflag, size = 0x4, scoped, tag = 'scoped memory for tpu_custom_call.1']
    #allocation7 [shape = 'u8[2048]{0}', space=vmem, size = 0x800, scoped, tag = 'output window, operand 0, single buffered']
    %7 = vsyncpa [#allocation3], 0
    %8 = vsyncpa [#allocation6], 0
    %9 = vsyncpa [#allocation4], 0
    // Predicated region
    $region2: #{tpu_custom_call.1} parent=1 // pred_check
      _
    $region3: #{tpu_custom_call.1} parent=1 // pred_check_branch
      %11 = sbr.rel (0) target = $region5
    $region4: #{tpu_custom_call.1} parent=1 // pred_region
      %s13 = ssub.s32 64, 64
      %14 = vsyncadd [#allocation3], %s13
      %s16 = sshll.u32 [#allocation2], 4
      %s17 = int_to_ptr.vmem [resolvable:$true] %s16
      %19 = dma.hbm_to_vmem [thread:$0]  %s0, 64, %s17, [#allocation3]
    $region5: #{tpu_custom_call.1} parent=1 // pred_fallthru
      _
    // Predicated region
    $region6: #{tpu_custom_call.1} parent=1 // pred_check
      _
    $region7: #{tpu_custom_call.1} parent=1 // pred_check_branch
      %21 = sbr.rel (0) target = $region9
    $region8: #{tpu_custom_call.1} parent=1 // pred_region
      %s23 = ssub.s32 32, 32
      %24 = vsyncadd [#allocation6], %s23
      %s26 = sshll.u32 [#allocation5], 4
      %s27 = int_to_ptr.vmem [resolvable:$true] %s26
      %29 = dma.hbm_to_vmem [thread:$0]  %s1, 32, %s27, [#allocation6]
    $region9: #{tpu_custom_call.1} parent=1 // pred_fallthru
      _
    // Predicated region
    $region10: #{tpu_custom_call.1} parent=1 // pred_check
      _
    $region11: #{tpu_custom_call.1} parent=1 // pred_check_branch
      %31 = sbr.rel (0) target = $region13
    $region12: #{tpu_custom_call.1} parent=1 // pred_region
      %32 = dma.done [#allocation3], 64
    $region13: #{tpu_custom_call.1} parent=1 // pred_fallthru
      _
    // Predicated region
    $region14: #{tpu_custom_call.1} parent=1 // pred_check
      _
    $region15: #{tpu_custom_call.1} parent=1 // pred_check_branch
      %34 = sbr.rel (0) target = $region17
    $region16: #{tpu_custom_call.1} parent=1 // pred_region
      %35 = dma.done [#allocation6], 32
    $region17: #{tpu_custom_call.1} parent=1 // pred_fallthru
      _
    %v36 = vld [vmem:[#allocation2] sm:$0xf]
    %v37 = vld [vmem:[#allocation5] sm:$0x3]
    %v39 = vlaneseq
    %v40 = vshrl.u32 %v39, 7
    %v41 = vsub.s32 0, %v40
    %v42 = vrot.slane %v37, %v41
    %v43 = vlaneseq
    %v44 = vshrl.u32 %v43, 7
    %v45 = vsub.s32 1, %v44
    %v46 = vrot.slane %v37, %v45
    %v47 = vcombine.low %v42, %v46
    %v49 = vunpack.c.l.s4 1983009808
    %v50 = vunpack.c.0.s8 %v49
    %v51 = vlaneseq
    %v52 = vshrl.u32 %v51, 7
    %v53 = vsub.s32 %v50, %v52
    %v54 = vrot.slane %v47, %v53
    %v56 = vadd.f32 %v36, %v54
    %57 = vst [vmem:[#allocation7] sm:$0xf] %v56
    // Predicated region
    $region18: #{tpu_custom_call.1} parent=1 // pred_check
      _
    $region19: #{tpu_custom_call.1} parent=1 // pred_check_branch
      %59 = sbr.rel (0) target = $region21
    $region20: #{tpu_custom_call.1} parent=1 // pred_region
      %s61 = ssub.s32 64, 64
      %62 = vsyncadd [#allocation4], %s61
      %s64 = sshll.u32 [#allocation7], 4
      %s65 = int_to_ptr.vmem [resolvable:$true] %s64
      %67 = dma.vmem_to_hbm [thread:$0]  %s65, 64, %s2, [#allocation4]
    $region21: #{tpu_custom_call.1} parent=1 // pred_fallthru
      _
    // Predicated region
    $region22: #{tpu_custom_call.1} parent=1 // pred_check
      _
    $region23: #{tpu_custom_call.1} parent=1 // pred_check_branch
      %69 = sbr.rel (0) target = $region25
    $region24: #{tpu_custom_call.1} parent=1 // pred_region
      %70 = dma.done [#allocation4], 64
    $region25: #{tpu_custom_call.1} parent=1 // pred_fallthru
      _
    %71 = vsyncpa [#allocation3], 1
    %72 = vsyncpa [#allocation6], 1
    %73 = vsyncpa [#allocation4], 1

</llo_original>
